<compile_context>
chip_gen: v6e
topology: v6e:2x2x1
jax: 0.10.0
libtpu: 0.0.40
codegen_flags: <defaults>
</compile_context>

<pallas_src>
import jax
import jax.numpy as jnp
from jax.experimental import pallas as pl
from jax.experimental.pallas import tpu as pltpu


def cond_gaussian_mean_kernel(scale_ref, y_ref, mean_ref):
    # Cast the SMEM scalar once to the input dtype; the elementwise multiply
    # then runs in the input's native width on the VPU.
    scale = scale_ref[0].astype(y_ref.dtype)
    mean_ref[...] = (y_ref[...] * scale).astype(mean_ref.dtype)


def _lane_dense_width(n, max_width=4096):
    """Largest multiple of 128 (<= max_width) that divides n; None if none."""
    best = None
    w = 128
    cap = min(n, max_width)
    while w <= cap:
        if n % w == 0:
            best = w
        w += 128
    return best


def _pick_row_tile(num_rows, num_cols, dtype,
                   vmem_budget_bytes=12 * 1024 * 1024,
                   min_split_bytes=2 * 1024 * 1024):
    """Row tile for the (rows, W) slab.

    - 4 buffered tile copies (double-buffered input + output) must fit a
      conservative 12 MiB budget (under every generation's default scoped
      VMEM limit; ~3 MiB tiles are already at the HBM-roofline plateau).
    - Rows aligned to the dtype's sublane packing (8 f32 / 16 bf16 / 32 int8).
    - Arrays bigger than ~2 MiB are capped at ~half the rows so the grid has
      >= 2 steps and both v7x TensorCores get work.
    """
    itemsize = jnp.dtype(dtype).itemsize
    sub = max(8, 32 // max(itemsize, 1))
    bytes_per_row = 4 * num_cols * itemsize
    tm = max(1, vmem_budget_bytes // max(bytes_per_row, 1))

    total_bytes = num_rows * num_cols * itemsize
    if total_bytes > min_split_bytes:
        half_rows = (num_rows + 1) // 2
        half = ((half_rows + sub - 1) // sub) * sub
        tm = min(tm, max(sub, half))

    if tm >= num_rows:
        return num_rows                      # full-extent block (always legal)
    return max(sub, (tm // sub) * sub)       # sublane/packing aligned


def basic_cond_gaussian(y, mean_scale, std, *, row_tile=None):
    """Pallas forward of BasicCondGaussian: (mean_scale * y, std broadcast)."""
    orig_shape = y.shape
    orig_dtype = y.dtype

    # ---- Lane-dense reflow of the flat element stream ----------------------
    flat = y.reshape(-1)
    n = flat.shape[0]
    w = _lane_dense_width(n)
    pad = 0
    if w is None:
        # Element count not divisible by 128: pad the tail (<=127 elems) so
        # every store is a full-lane vst, then pick a lane-dense width.
        n_pad = 128 * pl.cdiv(n, 128)
        pad = n_pad - n
        flat = jnp.pad(flat, (0, pad))
        w = _lane_dense_width(n_pad)
    rows = (n + pad) // w
    y2 = flat.reshape(rows, w)

    tm = row_tile if row_tile is not None else _pick_row_tile(rows, w, orig_dtype)
    tm = max(1, min(tm, rows))
    grid = (pl.cdiv(rows, tm),)

    scale_arr = jnp.asarray([mean_scale], jnp.float32)   # buffer 'mean_scale'

    mean2 = pl.pallas_call(
        cond_gaussian_mean_kernel,
        out_shape=jax.ShapeDtypeStruct((rows, w), orig_dtype),
        grid=grid,
        in_specs=[
            pl.BlockSpec(memory_space=pltpu.MemorySpace.SMEM),   # mean_scale
            pl.BlockSpec((tm, w), lambda i: (i, 0)),             # y row tile
        ],
        out_specs=pl.BlockSpec((tm, w), lambda i: (i, 0)),       # mean row tile
        compiler_params=pltpu.CompilerParams(
            dimension_semantics=("parallel",),   # shard tiles across TCs (v7x)
        ),
    )(scale_arr, y2)

    mean_flat = mean2.reshape(-1)
    if pad:
        mean_flat = mean_flat[:n]
    mean = mean_flat.reshape(orig_shape)

    # std.expand_as(y): lazy broadcast, not a materialized kernel write.
    std_out = jnp.broadcast_to(jnp.asarray(std, dtype=orig_dtype), orig_shape)
    return mean, std_out


def _check(y, mean_scale, std, **kw):
    mean_out, std_out = basic_cond_gaussian(y, mean_scale, std, **kw)
    jax.block_until_ready((mean_out, std_out))
    ref_mean = (mean_scale * y.astype(jnp.float32)).astype(y.dtype)
    ref_std = jnp.full(y.shape, std, dtype=y.dtype)
    assert mean_out.shape == y.shape and std_out.shape == y.shape
    assert mean_out.dtype == y.dtype and std_out.dtype == y.dtype
    tol = 1e-2 if y.dtype == jnp.bfloat16 else 1e-6
    assert jnp.allclose(mean_out.astype(jnp.float32),
                        ref_mean.astype(jnp.float32), atol=tol, rtol=tol)
    assert jnp.allclose(std_out.astype(jnp.float32),
                        ref_std.astype(jnp.float32), atol=tol, rtol=tol)


if __name__ == "__main__":
    key = jax.random.PRNGKey(0)
    k1, k2, k3, k4 = jax.random.split(key, 4)
    mean_scale = 2.0
    std = 0.1

    # Case 1: image-like f32 input; reflows to a single lane-dense (1, 2048) slab.
    y1 = jax.random.normal(k1, (2, 4, 16, 16), dtype=jnp.float32)
    _check(y1, mean_scale, std)

    # Case 2: multi-step grid with a masked remainder tile (rows=24, tm=16).
    y2 = jax.random.normal(k2, (24, 64, 64), dtype=jnp.float32)
    _check(y2, mean_scale, std, row_tile=16)

    # Case 3: element count not divisible by 128 -> padded-tail path.
    y3 = jax.random.normal(k3, (5, 7), dtype=jnp.float32)
    _check(y3, mean_scale, std)

    # Case 4: narrow channels-last bf16 input -> lane-dense reflow + bf16 multiply.
    y4 = jax.random.normal(k4, (4, 8, 16, 3), dtype=jnp.float32).astype(jnp.bfloat16)
    _check(y4, mean_scale, std)

    print("KERNEL_OK")
</pallas_src>

<mosaic_0001>
module attributes {stable_mosaic.version = 11 : i64} {
  func.func @cond_gaussian_mean_kernel(%arg0: i32, %arg1: memref<1xf32, #tpu.memory_space<smem>>, %arg2: memref<1x2048xf32, #tpu.memory_space<vmem>>, %arg3: memref<1x2048xf32, #tpu.memory_space<vmem>>) attributes {dimension_semantics = [#tpu.dimension_semantics<parallel>], iteration_bounds = array<i64: 1>, scalar_prefetch = 0 : i64, scratch_operands = 0 : i64, tpu.core_type = #tpu.core_type<tc>, window_params = [{transform_indices = @transform_0, window_bounds = array<i64: 1>}, {transform_indices = @transform_1, window_bounds = array<i64: 1, 2048>}, {transform_indices = @transform_2, window_bounds = array<i64: 1, 2048>}]} {
    %c0 = arith.constant 0 : index
    %0 = memref.load %arg1[%c0] : memref<1xf32, #tpu.memory_space<smem>>
    %c0_0 = arith.constant 0 : index
    %c0_1 = arith.constant 0 : index
    %1 = vector.load %arg2[%c0_0, %c0_1] : memref<1x2048xf32, #tpu.memory_space<vmem>>, vector<1x2048xf32>
    %2 = vector.broadcast %0 : f32 to vector<1x2048xf32>
    %3 = arith.mulf %1, %2 : vector<1x2048xf32>
    %c0_2 = arith.constant 0 : index
    %c0_3 = arith.constant 0 : index
    %4 = vector.load %arg3[%c0_2, %c0_3] : memref<1x2048xf32, #tpu.memory_space<vmem>>, vector<1x2048xf32>
    tpu.vector_store %arg3[%c0_2, %c0_3], %3 {strides = array<i32>} : memref<1x2048xf32, #tpu.memory_space<vmem>>, vector<1x2048xf32>,
    return
  }
  func.func @transform_0(%arg0: i32) -> i32 {
    %c0_i32 = arith.constant 0 : i32
    %c0_i32_0 = arith.constant 0 : i32
    return %c0_i32 : i32
  }
  func.func @transform_1(%arg0: i32) -> (i32, i32) {
    %c0_i32 = arith.constant 0 : i32
    %c0_i32_0 = arith.constant 0 : i32
    return %arg0, %c0_i32 : i32, i32
  }
  func.func @transform_2(%arg0: i32) -> (i32, i32) {
    %c0_i32 = arith.constant 0 : i32
    %c0_i32_0 = arith.constant 0 : i32
    return %arg0, %c0_i32 : i32, i32
  }
}

</mosaic_0001>

<llo_original>
// kernel: tpu_custom_call.1
$region0: #{tpu_custom_call.1}
  #allocation0 [shape = 'u32[]', space=smem, size = 0x4, offset = 0x4, fixed_abs, tag = 'smem constant byte address 0x4 - core index']
  #allocation1 [shape = 'u32[144,128]{1,0:T(1,128)}', space=vmem, size = 0x12000, scoped, tag = 'internal scratch']
  #allocation2 [shape = 'f32[1]{0:T(128)S(6)}', space=smem, size = 0x200, scoped, tag = 'scoped memory for tpu_custom_call.1']
  %s0 = inlined_call_operand.<no memory space> [shape: f32[1], index: 0, kind: input, shape index: {}]
  %s1 = inlined_call_operand.hbm [shape: f32[1,2048], index: 1, kind: input, shape index: {}]
  %s2 = inlined_call_operand.hbm [shape: f32[1,2048], index: 2, kind: output, shape index: {}]
  %s3 = sld [smem:[#allocation0]]
  $region22: #{tpu_custom_call.1} parent=0
    _
  %s5 = ssub.s32 1, %s3
  %s6 = scalar_select 0, %s5, %s3
  %7 = sst [smem:[#allocation2]] %s0
  $region1: #{tpu_custom_call.1} parent=0
    #allocation3 [shape = 'u8[8192]{0}', space=vmem, size = 0x2000, scoped, tag = 'input window, operand 1, single buffered']
    #allocation4 [shape = 's32[1]{0}', space=sflag, size = 0x4, scoped, tag = 'scoped memory for tpu_custom_call.1']
    #allocation5 [shape = 's32[1]{0}', space=sflag, size = 0x4, scoped, tag = 'scoped memory for tpu_custom_call.1']
    #allocation6 [shape = 'u8[8192]{0}', space=vmem, size = 0x2000, scoped, tag = 'output window, operand 0, single buffered']
    %8 = vsyncpa [#allocation4], 0
    %9 = vsyncpa [#allocation5], 0
    // Predicated region
    $region2: #{tpu_custom_call.1} parent=1 // pred_check
      _
    $region3: #{tpu_custom_call.1} parent=1 // pred_check_branch
      %11 = sbr.rel (0) target = $region5
    $region4: #{tpu_custom_call.1} parent=1 // pred_region
      _
    $region5: #{tpu_custom_call.1} parent=1 // pred_fallthru
      _
    // Predicated region
    $region6: #{tpu_custom_call.1} parent=1 // pred_check
      _
    $region7: #{tpu_custom_call.1} parent=1 // pred_check_branch
      %13 = sbr.rel (0) target = $region9
    $region8: #{tpu_custom_call.1} parent=1 // pred_region
      %s15 = ssub.s32 256, 256
      %16 = vsyncadd [#allocation4], %s15
      %s18 = sshll.u32 [#allocation3], 4
      %s19 = int_to_ptr.vmem [resolvable:$true] %s18
      %21 = dma.hbm_to_vmem [thread:$0]  %s1, 256, %s19, [#allocation4]
    $region9: #{tpu_custom_call.1} parent=1 // pred_fallthru
      _
    // Predicated region
    $region10: #{tpu_custom_call.1} parent=1 // pred_check
      _
    $region11: #{tpu_custom_call.1} parent=1 // pred_check_branch
      %23 = sbr.rel (0) target = $region13
    $region12: #{tpu_custom_call.1} parent=1 // pred_region
      %24 = dma.done [#allocation4], 256
    $region13: #{tpu_custom_call.1} parent=1 // pred_fallthru
      _
    %s25 = sld [smem:[#allocation2]]
    %v26 = vld [vmem:[#allocation3] sm:$0xff]
    %v27 = vld [vmem:[#allocation3 + $0x8] sm:$0xff]
    %v28 = vstv %s25
    %v29 = vmul.f32 %v26, %v28
    %v30 = vmul.f32 %v27, %v28
    %31 = vst [vmem:[#allocation6] sm:$0xff] %v29
    %32 = vst [vmem:[#allocation6 + $0x8] sm:$0xff] %v30
    // Predicated region
    $region14: #{tpu_custom_call.1} parent=1 // pred_check
      _
    $region15: #{tpu_custom_call.1} parent=1 // pred_check_branch
      %34 = sbr.rel (0) target = $region17
    $region16: #{tpu_custom_call.1} parent=1 // pred_region
      %s36 = ssub.s32 256, 256
      %37 = vsyncadd [#allocation5], %s36
      %s39 = sshll.u32 [#allocation6], 4
      %s40 = int_to_ptr.vmem [resolvable:$true] %s39
      %42 = dma.vmem_to_hbm [thread:$0]  %s40, 256, %s2, [#allocation5]
    $region17: #{tpu_custom_call.1} parent=1 // pred_fallthru
      _
    // Predicated region
    $region18: #{tpu_custom_call.1} parent=1 // pred_check
      _
    $region19: #{tpu_custom_call.1} parent=1 // pred_check_branch
      %44 = sbr.rel (0) target = $region21
    $region20: #{tpu_custom_call.1} parent=1 // pred_region
      %45 = dma.done [#allocation5], 256
    $region21: #{tpu_custom_call.1} parent=1 // pred_fallthru
      _
    %46 = vsyncpa [#allocation4], 1
    %47 = vsyncpa [#allocation5], 1

</llo_original>
